<compile_context>
chip_gen: v7x
topology: tpu7x:2x2x1
jax: 0.10.0
libtpu: 0.0.40
codegen_flags: <defaults>
</compile_context>

<pallas_src>
import jax
import jax.numpy as jnp
from jax.experimental import pallas as pl
from jax.experimental.pallas import tpu as pltpu


def _scale_mul_kernel(scale_ref, x_ref, o_ref):
    # scale_ref: (bn, 1) per-row scale; x_ref/o_ref: (bn, bd) lane-dense tiles.
    # Per-row scale broadcasts along the lane axis (cheap VPU broadcast).
    o_ref[...] = (x_ref[...] * scale_ref[...]).astype(o_ref.dtype)


def _round_up(v, m):
    return ((v + m - 1) // m) * m


# Per-pipelined-buffer VMEM budget. 2 MiB x (2 input bufs + 2 output bufs)
# = 8 MiB, comfortably inside scoped VMEM on v5e/v6e/v7x while being large
# enough to sit at ~85%+ of HBM roofline (per-step overhead ~0.35 us).
_BUF_BUDGET = 2 << 20
# Below this total size, kernel-launch + pipeline prologue dominates; let XLA
# fuse the broadcast multiply instead.
_FAST_PATH_BYTES = 512 * 1024


def _row_scale_multiply(x2, scale2):
    """out[n, :] = x2[n, :] * scale2[n, 0] via a tiled Pallas kernel."""
    N, D = x2.shape
    itemsize = x2.dtype.itemsize
    sub = max(8, 32 // itemsize)      # sublane multiple: 8 f32, 16 bf16, 32 int8
    elems_budget = _BUF_BUDGET // itemsize

    pad_d = 0
    if D % 128 == 0:
        # Lane-aligned D: pick bn first (clamped by N, but leaving room for at
        # least 128 lanes), then grow bd to fill the per-buffer budget.
        bn = min(_round_up(N, sub),
                 max(sub, (elems_budget // 128) // sub * sub))
        bd = min(D, max(128, (elems_budget // bn) // 128 * 128))
    elif sub * D * itemsize <= 2 * _BUF_BUDGET:
        # Ragged D: a full-extent last-dim block is exempt from the 128 rule,
        # so no pad/slice HBM round trip. Shrink bn to respect the budget.
        bd = D
        bn = min(_round_up(N, sub),
                 max(sub, (elems_budget // D) // sub * sub))
    else:
        # TODO(synk): pathological ragged D (> ~1M f32 elems per row) - fall
        # back to pad + slice; rare, and keeps VMEM usage bounded.
        pad_d = _round_up(D, 128) - D
        x2 = jnp.pad(x2, ((0, 0), (0, pad_d)))
        D = D + pad_d
        bn = min(_round_up(N, sub),
                 max(sub, (elems_budget // 128) // sub * sub))
        bd = min(D, max(128, (elems_budget // bn) // 128 * 128))

    gi, gj = pl.cdiv(N, bn), pl.cdiv(D, bd)

    # v7x has 2 TensorCores: if the whole (non-tiny) array landed in a single
    # block, split the row axis (or lane axis) so both cores get work.
    if gi * gj == 1 and N * D * itemsize >= (1 << 20):
        if bn > sub:
            bn = _round_up((bn + 1) // 2, sub)
        elif bd > 128 and D % 128 == 0:
            bd = _round_up((bd + 1) // 2, 128)
        gi, gj = pl.cdiv(N, bn), pl.cdiv(D, bd)

    out = pl.pallas_call(
        _scale_mul_kernel,
        out_shape=jax.ShapeDtypeStruct((N, D), x2.dtype),
        grid=(gi, gj),
        in_specs=[
            pl.BlockSpec((bn, 1), lambda i, j: (i, 0)),    # per-row scale
            pl.BlockSpec((bn, bd), lambda i, j: (i, j)),   # activations
        ],
        out_specs=pl.BlockSpec((bn, bd), lambda i, j: (i, j)),
        compiler_params=pltpu.CompilerParams(
            dimension_semantics=("parallel", "parallel"),
            vmem_limit_bytes=32 * 1024 * 1024),
        cost_estimate=pl.CostEstimate(
            flops=N * D,
            transcendentals=0,
            bytes_accessed=2 * N * D * itemsize + N * itemsize),
    )(scale2, x2)

    if pad_d:
        out = out[:, :D - pad_d]
    return out


def stochastic_depth(x, p, mode, training=True, *, key=None, seed=0):
    if p < 0.0 or p > 1.0:
        raise ValueError(f"drop probability has to be between 0 and 1, but got {p}")
    if mode not in ("batch", "row"):
        raise ValueError(f"mode has to be either 'batch' or 'row', but got {mode}")
    if not training or p == 0.0:
        return x

    if key is None:
        key = jax.random.PRNGKey(seed)
    survival_rate = 1.0 - p

    if mode == "batch":
        # One Bernoulli draw for the whole tensor; a fused scalar multiply is
        # already at HBM roofline under XLA, so no Pallas launch here.
        keep = jax.random.bernoulli(key, survival_rate, ()).astype(x.dtype)
        scale = keep / survival_rate if survival_rate > 0.0 else keep
        return x * scale.astype(x.dtype)

    # mode == "row": one draw per batch row (noise carried in input dtype,
    # like torchvision's in-place div_; bf16 inputs get a bf16-rounded scale).
    N = x.shape[0]
    keep = jax.random.bernoulli(key, survival_rate, (N, 1)).astype(x.dtype)
    scale = (keep / survival_rate).astype(x.dtype) if survival_rate > 0.0 else keep

    # Small-tensor fast path: launch + pipeline overhead dominates tiny inputs;
    # XLA's fused broadcast-multiply is already at roofline there.
    if x.size * x.dtype.itemsize < _FAST_PATH_BYTES:
        return x * scale.reshape((N,) + (1,) * (x.ndim - 1))

    x2 = x.reshape(N, -1)
    out2 = _row_scale_multiply(x2, scale)
    return out2.reshape(x.shape)


class StochasticDepth:
    """JAX/Pallas port of torchvision's StochasticDepth module."""

    def __init__(self, p: float, mode: str):
        self.p = p
        self.mode = mode
        self.training = True

    def __call__(self, x, *, key=None, seed=0):
        return stochastic_depth(x, self.p, self.mode, self.training,
                                key=key, seed=seed)

    def __repr__(self):
        return f"StochasticDepth(p={self.p}, mode={self.mode})"


def _check_row_semantics(x, y, survival_rate):
    """Each output row must be exactly 0 or x_row / survival_rate."""
    N = x.shape[0]
    xf = x.reshape(N, -1).astype(jnp.float32)
    yf = y.reshape(N, -1).astype(jnp.float32)
    is_zero = jnp.all(yf == 0.0, axis=1)
    tol = 1e-5 * (1.0 + jnp.abs(xf))
    is_scaled = jnp.all(jnp.abs(yf - xf / survival_rate) <= tol, axis=1)
    assert bool(jnp.all(is_zero | is_scaled)), \
        "row-mode output must be 0 or x/survival_rate per row"


if __name__ == "__main__":
    root = jax.random.PRNGKey(0)
    k_small, k_large, k_ragged = jax.random.split(root, 3)

    # 1) Small NCHW-like input (batch=2, channels=4, spatial=16x16) -> tiny,
    #    takes the XLA fast path but exercises the exact module semantics.
    x_small = jax.random.normal(k_small, (2, 4, 16, 16), dtype=jnp.float32)
    sd_row = StochasticDepth(p=0.5, mode="row")
    y_small = jax.block_until_ready(sd_row(x_small, seed=1234))
    _check_row_semantics(x_small, y_small, 0.5)

    # 2) Larger lane-aligned input -> Pallas kernel path (D = 8*32*32 = 8192).
    x_large = jax.random.normal(k_large, (64, 8, 32, 32), dtype=jnp.float32)
    y_large = jax.block_until_ready(sd_row(x_large, seed=7))
    _check_row_semantics(x_large, y_large, 0.5)

    # 3) Ragged-D input (D = 3*20*20 = 1200, not a multiple of 128) -> Pallas
    #    kernel path with a full-extent last-dim block (no pad/slice).
    x_ragged = jax.random.normal(k_ragged, (128, 3, 20, 20), dtype=jnp.float32)
    sd_row2 = StochasticDepth(p=0.25, mode="row")
    y_ragged = jax.block_until_ready(sd_row2(x_ragged, seed=99))
    _check_row_semantics(x_ragged, y_ragged, 0.75)

    # 4) Batch mode: whole tensor kept/scaled or zeroed (scalar multiply, XLA).
    sd_batch = StochasticDepth(p=0.2, mode="batch")
    y_batch = jax.block_until_ready(sd_batch(x_small, seed=42))
    is_zero_b = bool(jnp.allclose(y_batch, 0.0))
    is_scaled_b = bool(jnp.allclose(y_batch, x_small / 0.8, rtol=1e-6, atol=1e-6))
    assert is_zero_b or is_scaled_b, "batch-mode output must be 0 or x/survival_rate"

    # 5) Eval mode: identity.
    sd_eval = StochasticDepth(p=0.5, mode="row")
    sd_eval.training = False
    y_eval = jax.block_until_ready(sd_eval(x_small))
    assert bool(jnp.allclose(y_eval, x_small)), "eval mode must be identity"

    print("KERNEL_OK")
</pallas_src>

<mosaic_0001>
module attributes {stable_mosaic.version = 11 : i64} {
  func.func @_scale_mul_kernel(%arg0: i32, %arg1: i32, %arg2: memref<32x1xf32, #tpu.memory_space<vmem>>, %arg3: memref<32x8192xf32, #tpu.memory_space<vmem>>, %arg4: memref<32x8192xf32, #tpu.memory_space<vmem>>) attributes {dimension_semantics = [#tpu.dimension_semantics<parallel>, #tpu.dimension_semantics<parallel>], iteration_bounds = array<i64: 2, 1>, scalar_prefetch = 0 : i64, scratch_operands = 0 : i64, tpu.core_type = #tpu.core_type<tc>, window_params = [{transform_indices = @transform_0, window_bounds = array<i64: 32, 1>}, {transform_indices = @transform_1, window_bounds = array<i64: 32, 8192>}, {transform_indices = @transform_2, window_bounds = array<i64: 32, 8192>}]} {
    %c0 = arith.constant 0 : index
    %c0_0 = arith.constant 0 : index
    %0 = vector.load %arg3[%c0, %c0_0] : memref<32x8192xf32, #tpu.memory_space<vmem>>, vector<32x8192xf32>
    %c0_1 = arith.constant 0 : index
    %c0_2 = arith.constant 0 : index
    %1 = vector.load %arg2[%c0_1, %c0_2] : memref<32x1xf32, #tpu.memory_space<vmem>>, vector<32x1xf32>
    %2 = vector.broadcast %1 : vector<32x1xf32> to vector<32x8192xf32>
    %3 = arith.mulf %0, %2 : vector<32x8192xf32>
    %c0_3 = arith.constant 0 : index
    %c0_4 = arith.constant 0 : index
    %4 = vector.load %arg4[%c0_3, %c0_4] : memref<32x8192xf32, #tpu.memory_space<vmem>>, vector<32x8192xf32>
    tpu.vector_store %arg4[%c0_3, %c0_4], %3 {strides = array<i32>} : memref<32x8192xf32, #tpu.memory_space<vmem>>, vector<32x8192xf32>,
    return
  }
  func.func @transform_0(%arg0: i32, %arg1: i32) -> (i32, i32) {
    %c0_i32 = arith.constant 0 : i32
    %c0_i32_0 = arith.constant 0 : i32
    return %arg0, %c0_i32 : i32, i32
  }
  func.func @transform_1(%arg0: i32, %arg1: i32) -> (i32, i32) {
    %c0_i32 = arith.constant 0 : i32
    return %arg0, %arg1 : i32, i32
  }
  func.func @transform_2(%arg0: i32, %arg1: i32) -> (i32, i32) {
    %c0_i32 = arith.constant 0 : i32
    return %arg0, %arg1 : i32, i32
  }
}

</mosaic_0001>

<llo_original>
// kernel: tpu_custom_call.1
$region0: #{tpu_custom_call.1}
  #allocation0 [shape = 'u32[]', space=smem, size = 0x4, offset = 0x4, fixed_abs, tag = 'smem constant byte address 0x4 - core index']
  #allocation1 [shape = 'u32[144,128]{1,0:T(1,128)}', space=vmem, size = 0x12000, scoped, tag = 'internal scratch']
  %s0 = inlined_call_operand.vmem [shape: f32[64,1], index: 0, kind: input, shape index: {}]
  %s1 = inlined_call_operand.hbm [shape: f32[64,8192], index: 1, kind: input, shape index: {}]
  %s2 = inlined_call_operand.hbm [shape: f32[64,8192], index: 2, kind: output, shape index: {}]
  %s3 = sld [smem:[#allocation0]]
  $region45: #{tpu_custom_call.1} parent=0
    _
  %s5 = ssub.s32 1, %s3
  %s6 = scalar_select 0, %s5, %s3
  $region1: #{tpu_custom_call.1} parent=0
    #allocation2 [shape = 'u8[2097152]{0}', space=vmem, size = 0x200000, scoped, tag = 'input window, operand 1']
    #allocation3 [shape = 's32[2]{0}', space=sflag, size = 0x8, scoped, tag = 'scoped memory for tpu_custom_call.1']
    #allocation4 [shape = 's32[2]{0}', space=sflag, size = 0x8, scoped, tag = 'scoped memory for tpu_custom_call.1']
    #allocation5 [shape = 'u8[2097152]{0}', space=vmem, size = 0x200000, scoped, tag = 'output window, operand 0']
    %7 = vsyncpa [#allocation3], 0
    %s8 = scalar_lea.sflag [#allocation3], 1
    %9 = vsyncpa %s8, 0
    %10 = vsyncpa [#allocation4], 0
    %s11 = scalar_lea.sflag [#allocation4], 1
    %12 = vsyncpa %s11, 0
    loop: start=0, step=1, limit=4
    $region2: #{tpu_custom_call.1} parent=1 // loop_pre_header
      _
    $region3: #{tpu_custom_call.1} parent=1 // loop_header
      %s14 = sphi 0, %s18
      %p15 = scmp.ge.s32.totalorder %s14, 4
      %s21 = sphi 0, %s33
      %s22 = sphi 0, %s29
      %s23 = sphi 0, %s21
      %s24 = sphi 0, %s22
      %s25 = sphi 0, %s23
      %s26 = sphi 0, %s24
      %s36 = sphi 0, %s38
      %s39 = sphi 0, %s36
      %s40 = sphi 0, %s39
      %s56 = sphi 0, %s40
      %s64 = sphi 0, %s66
      %s67 = sphi 0, %s64
      %s68 = sphi 0, %s67
      %s84 = sphi 0, %s68
      %s92 = sphi 0, %s94
      %s95 = sphi 0, %s92
      %s96 = sphi 0, %s95
      %s112 = sphi 0, %s96
    $region4: #{tpu_custom_call.1} parent=1 // loop_header_branch
      %17 = sbr.rel (%p15) target = $region8
    $region5: #{tpu_custom_call.1} parent=1 // loop_body
      %s19 = ssub.s32 %s14, 1
      %s20 = ssub.s32 %s14, 2
      %s27 = sadd.s32 1, %s22
      %p28 = scmp.ge.s32.totalorder %s27, 1
      %s29 = scalar_select %p28, 0, %s27
      %s30 = sadd.s32 1, %s21
      %s31 = scalar_select %p28, %s30, %s21
      %p32 = scmp.ge.s32.totalorder %s31, 2
      %s33 = scalar_select %p32, 0, %s31
      %s34 = ssub.s32 %s21, %s33
      %p35 = scmp.eq.s32.totalorder %s34, 0
      %s37 = sadd.s32 %s36, 1
      %s38 = scalar_select %p35, %s36, %s37
      %p41 = pneg %p35
      %p42 = scmp.eq.s32.totalorder %s14, 1
      %p43 = por %p41, %p42
      %p44 = scmp.ne.s32.totalorder %s36, %s39
      %p45 = scmp.eq.s32.totalorder %s14, 0
      %p46 = por %p44, %p45
      %p47 = scmp.ne.s32.totalorder %s36, %s39
      %p48 = scmp.eq.s32.totalorder %s19, 1
      %p49 = por %p47, %p48
      %p50 = scmp.ne.s32.totalorder %s39, %s40
      %p51 = scmp.eq.s32.totalorder %s19, 0
      %p52 = por %p50, %p51
      %p53 = scmp.ne.s32.totalorder %s39, %s40
      %p54 = scmp.eq.s32.totalorder %s20, 1
      %p55 = por %p53, %p54
      %p57 = scmp.ne.s32.totalorder %s40, %s56
      %p58 = scmp.eq.s32.totalorder %s20, 0
      %p59 = por %p57, %p58
      %s60 = ssub.s32 %s21, %s33
      %s61 = ssub.s32 %s22, %s29
      %s62 = sor.u32 %s60, %s61
      %p63 = scmp.eq.s32.totalorder %s62, 0
      %s65 = sadd.s32 %s64, 1
      %s66 = scalar_select %p63, %s64, %s65
      %p69 = pneg %p63
      %p70 = scmp.eq.s32.totalorder %s14, 1
      %p71 = por %p69, %p70
      %p72 = scmp.ne.s32.totalorder %s64, %s67
      %p73 = scmp.eq.s32.totalorder %s14, 0
      %p74 = por %p72, %p73
      %p75 = scmp.ne.s32.totalorder %s64, %s67
      %p76 = scmp.eq.s32.totalorder %s19, 1
      %p77 = por %p75, %p76
      %p78 = scmp.ne.s32.totalorder %s67, %s68
      %p79 = scmp.eq.s32.totalorder %s19, 0
      %p80 = por %p78, %p79
      %p81 = scmp.ne.s32.totalorder %s67, %s68
      %p82 = scmp.eq.s32.totalorder %s20, 1
      %p83 = por %p81, %p82
      %p85 = scmp.ne.s32.totalorder %s68, %s84
      %p86 = scmp.eq.s32.totalorder %s20, 0
      %p87 = por %p85, %p86
      %s88 = ssub.s32 %s21, %s33
      %s89 = ssub.s32 %s22, %s29
      %s90 = sor.u32 %s88, %s89
      %p91 = scmp.eq.s32.totalorder %s90, 0
      %s93 = sadd.s32 %s92, 1
      %s94 = scalar_select %p91, %s92, %s93
      %p97 = pneg %p91
      %p98 = scmp.eq.s32.totalorder %s14, 1
      %p99 = por %p97, %p98
      %p100 = scmp.ne.s32.totalorder %s92, %s95
      %p101 = scmp.eq.s32.totalorder %s14, 0
      %p102 = por %p100, %p101
      %p103 = scmp.ne.s32.totalorder %s92, %s95
      %p104 = scmp.eq.s32.totalorder %s19, 1
      %p105 = por %p103, %p104
      %p106 = scmp.ne.s32.totalorder %s95, %s96
      %p107 = scmp.eq.s32.totalorder %s19, 0
      %p108 = por %p106, %p107
      %p109 = scmp.ne.s32.totalorder %s95, %s96
      %p110 = scmp.eq.s32.totalorder %s20, 1
      %p111 = por %p109, %p110
      %p113 = scmp.ne.s32.totalorder %s96, %s112
      %p114 = scmp.eq.s32.totalorder %s20, 0
      %p115 = por %p113, %p114
      %p116 = scmp.le.s32.totalorder 1, %s14
      %p117 = scmp.lt.s32.totalorder %s14, 3
      %p118 = pnand %p116, %p117
      %p119 = pneg %p118
      // Predicated region
      $region9: #{tpu_custom_call.1} parent=5 // pred_check
        _
      $region10: #{tpu_custom_call.1} parent=5 // pred_check_branch
        %121 = sbr.rel (%p118) target = $region12
      $region11: #{tpu_custom_call.1} parent=5 // pred_region
        %s122 = ssub.s32 %s14, 1
      $region12: #{tpu_custom_call.1} parent=5 // pred_fallthru
        _
      %p123 = scmp.lt.s32.totalorder %s14, 2
      // Predicated region
      $region13: #{tpu_custom_call.1} parent=5 // pred_check
        %p124 = pneg %p123
      $region14: #{tpu_custom_call.1} parent=5 // pred_check_branch
        %126 = sbr.rel (%p124) target = $region16
      $region15: #{tpu_custom_call.1} parent=5 // pred_region
        // Predicated region
        $region17: #{tpu_custom_call.1} parent=15 // pred_check
          %p127 = pneg %p46
        $region18: #{tpu_custom_call.1} parent=15 // pred_check_branch
          %129 = sbr.rel (%p127) target = $region20
        $region19: #{tpu_custom_call.1} parent=15 // pred_region
          %s130 = smul.u32 4, %s21
          %p131 = scmp.lt.s32.totalorder %s130, 7
          %s132 = scalar_select %p131, %s130, 7
          %s133 = smul.addr %s132, 8
          %s134 = scalar_lea.vmem %s0, %s133
          %s135 = smul.u32 4, %s21
        $region20: #{tpu_custom_call.1} parent=15 // pred_fallthru
          _
        // Predicated region
        $region21: #{tpu_custom_call.1} parent=15 // pred_check
          %p136 = pneg %p74
        $region22: #{tpu_custom_call.1} parent=15 // pred_check_branch
          %138 = sbr.rel (%p136) target = $region24
        $region23: #{tpu_custom_call.1} parent=15 // pred_region
          %s139 = sand.u32 %s64, 1
          %s140 = scalar_lea.sflag [#allocation3], %s139
          %s141 = sand.u32 %s64, 1
          %s142 = smul.addr %s141, 2048
          %s143 = scalar_lea.vmem [#allocation2], %s142
          %s144 = smul.u32 4, %s21
          %s145 = smul.u32 64, %s22
          %s147 = ssub.s32 32768, 32768
          %148 = vsyncadd %s140, %s147
          %s149 = smul.addr %s144, 64
          %s150 = sadd.s32 %s145, %s149
          %s151 = smul.addr %s150, 128
          %s152 = scalar_lea.hbm %s1, %s151
          %s153 = sshll.u32 %s143, 4
          %s154 = int_to_ptr.vmem [resolvable:$true] %s153
          %159 = dma.hbm_to_vmem [thread:$0]  %s152, 32768, %s154, %s140, 8192, 8192, 512
        $region24: #{tpu_custom_call.1} parent=15 // pred_fallthru
          _
      $region16: #{tpu_custom_call.1} parent=5 // pred_fallthru
        _
      %p160 = scmp.le.s32.totalorder 1, %s14
      %p161 = scmp.lt.s32.totalorder %s14, 3
      %p162 = pnand %p160, %p161
      %p163 = pneg %p162
      // Predicated region
      $region25: #{tpu_custom_call.1} parent=5 // pred_check
        _
      $region26: #{tpu_custom_call.1} parent=5 // pred_check_branch
        %165 = sbr.rel (%p162) target = $region28
      $region27: #{tpu_custom_call.1} parent=5 // pred_region
        %s166 = ssub.s32 %s14, 1
        %s167 = sand.u32 %s67, 1
        %s168 = scalar_lea.sflag [#allocation3], %s167
        %s169 = sand.u32 %s67, 1
        %s170 = smul.addr %s169, 2048
        %s171 = scalar_lea.vmem [#allocation2], %s170
        // Predicated region
        $region29: #{tpu_custom_call.1} parent=27 // pred_check
          %p172 = pneg %p80
        $region30: #{tpu_custom_call.1} parent=27 // pred_check_branch
          %174 = sbr.rel (%p172) target = $region32
        $region31: #{tpu_custom_call.1} parent=27 // pred_region
          %175 = dma.done %s168, 32768
        $region32: #{tpu_custom_call.1} parent=27 // pred_fallthru
          _
        %s176 = smul.u32 4, %s23
        %p177 = scmp.lt.s32.totalorder %s176, 7
        %s178 = scalar_select %p177, %s176, 7
        %s179 = smul.addr %s178, 8
        %s180 = scalar_lea.vmem %s0, %s179
        %p181 = pneg %p52
        %p182 = pneg %p49
        %s183 = sand.u32 %s67, 1
        %s184 = scalar_lea.sflag [#allocation3], %s183
        %s185 = sand.u32 %s67, 1
        %s186 = smul.addr %s185, 2048
        %s187 = scalar_lea.vmem [#allocation2], %s186
        %p188 = pneg %p80
        %p189 = pneg %p77
        %p190 = pneg %p108
        %p191 = pneg %p105
        %s192 = sand.u32 %s95, 1
        %s193 = scalar_lea.sflag [#allocation4], %s192
        %s194 = sand.u32 %s95, 1
        %s195 = smul.addr %s194, 2048
        %s196 = scalar_lea.vmem [#allocation5], %s195
        %s197 = smul.u32 4, %s23
        %p198 = scmp.lt.s32.totalorder %s197, 7
        %s199 = scalar_select %p198, %s197, 7
        %s200 = smul.addr %s199, 8
        %s201 = scalar_lea.vmem %s0, %s200
        %s202 = smul.u32 4, %s23
        %s203 = smul.u32 4, %s23
        %s204 = smul.u32 64, %s24
        %s205 = smul.u32 4, %s23
        %s206 = smul.u32 64, %s24
        %v207 = vld [vmem:[%s171] sm:$0xff]
        %v208 = vld [vmem:[%s171 + $0x8] sm:$0xff]
        %v209 = vld [vmem:[%s171 + $0x10] sm:$0xff]
        %v210 = vld [vmem:[%s171 + $0x18] sm:$0xff]
        %v211 = vld [vmem:[%s171 + $0x20] sm:$0xff]
        %v212 = vld [vmem:[%s171 + $0x28] sm:$0xff]
        %v213 = vld [vmem:[%s171 + $0x30] sm:$0xff]
        %v214 = vld [vmem:[%s171 + $0x38] sm:$0xff]
        %v215 = vld [vmem:[%s171 + $0x40] sm:$0xff]
        %v216 = vld [vmem:[%s171 + $0x48] sm:$0xff]
        %v217 = vld [vmem:[%s171 + $0x50] sm:$0xff]
        %v218 = vld [vmem:[%s171 + $0x58] sm:$0xff]
        %v219 = vld [vmem:[%s171 + $0x60] sm:$0xff]
        %v220 = vld [vmem:[%s171 + $0x68] sm:$0xff]
        %v221 = vld [vmem:[%s171 + $0x70] sm:$0xff]
        %v222 = vld [vmem:[%s171 + $0x78] sm:$0xff]
        %v223 = vld [vmem:[%s171 + $0x80] sm:$0xff]
        %v224 = vld [vmem:[%s171 + $0x88] sm:$0xff]
        %v225 = vld [vmem:[%s171 + $0x90] sm:$0xff]
        %v226 = vld [vmem:[%s171 + $0x98] sm:$0xff]
        %v227 = vld [vmem:[%s171 + $0xa0] sm:$0xff]
        %v228 = vld [vmem:[%s171 + $0xa8] sm:$0xff]
        %v229 = vld [vmem:[%s171 + $0xb0] sm:$0xff]
        %v230 = vld [vmem:[%s171 + $0xb8] sm:$0xff]
        %v231 = vld [vmem:[%s171 + $0xc0] sm:$0xff]
        %v232 = vld [vmem:[%s171 + $0xc8] sm:$0xff]
        %v233 = vld [vmem:[%s171 + $0xd0] sm:$0xff]
        %v234 = vld [vmem:[%s171 + $0xd8] sm:$0xff]
        %v235 = vld [vmem:[%s171 + $0xe0] sm:$0xff]
        %v236 = vld [vmem:[%s171 + $0xe8] sm:$0xff]
        %v237 = vld [vmem:[%s171 + $0xf0] sm:$0xff]
        %v238 = vld [vmem:[%s171 + $0xf8] sm:$0xff]
        %v239 = vld [vmem:[%s171 + $0x100] sm:$0xff]
        %v240 = vld [vmem:[%s171 + $0x108] sm:$0xff]
        %v241 = vld [vmem:[%s171 + $0x110] sm:$0xff]
        %v242 = vld [vmem:[%s171 + $0x118] sm:$0xff]
        %v243 = vld [vmem:[%s171 + $0x120] sm:$0xff]
        %v244 = vld [vmem:[%s171 + $0x128] sm:$0xff]
        %v245 = vld [vmem:[%s171 + $0x130] sm:$0xff]
        %v246 = vld [vmem:[%s171 + $0x138] sm:$0xff]
        %v247 = vld [vmem:[%s171 + $0x140] sm:$0xff]
        %v248 = vld [vmem:[%s171 + $0x148] sm:$0xff]
        %v249 = vld [vmem:[%s171 + $0x150] sm:$0xff]
        %v250 = vld [vmem:[%s171 + $0x158] sm:$0xff]
        %v251 = vld [vmem:[%s171 + $0x160] sm:$0xff]
        %v252 = vld [vmem:[%s171 + $0x168] sm:$0xff]
        %v253 = vld [vmem:[%s171 + $0x170] sm:$0xff]
        %v254 = vld [vmem:[%s171 + $0x178] sm:$0xff]
        %v255 = vld [vmem:[%s171 + $0x180] sm:$0xff]
        %v256 = vld [vmem:[%s171 + $0x188] sm:$0xff]
        %v257 = vld [vmem:[%s171 + $0x190] sm:$0xff]
        %v258 = vld [vmem:[%s171 + $0x198] sm:$0xff]
        %v259 = vld [vmem:[%s171 + $0x1a0] sm:$0xff]
        %v260 = vld [vmem:[%s171 + $0x1a8] sm:$0xff]
        %v261 = vld [vmem:[%s171 + $0x1b0] sm:$0xff]
        %v262 = vld [vmem:[%s171 + $0x1b8] sm:$0xff]
        %v263 = vld [vmem:[%s171 + $0x1c0] sm:$0xff]
        %v264 = vld [vmem:[%s171 + $0x1c8] sm:$0xff]
        %v265 = vld [vmem:[%s171 + $0x1d0] sm:$0xff]
        %v266 = vld [vmem:[%s171 + $0x1d8] sm:$0xff]
        %v267 = vld [vmem:[%s171 + $0x1e0] sm:$0xff]
        %v268 = vld [vmem:[%s171 + $0x1e8] sm:$0xff]
        %v269 = vld [vmem:[%s171 + $0x1f0] sm:$0xff]
        %v270 = vld [vmem:[%s171 + $0x1f8] sm:$0xff]
        %v271 = vld [vmem:[%s171 + $0x200] sm:$0xff]
        %v272 = vld [vmem:[%s171 + $0x208] sm:$0xff]
        %v273 = vld [vmem:[%s171 + $0x210] sm:$0xff]
        %v274 = vld [vmem:[%s171 + $0x218] sm:$0xff]
        %v275 = vld [vmem:[%s171 + $0x220] sm:$0xff]
        %v276 = vld [vmem:[%s171 + $0x228] sm:$0xff]
        %v277 = vld [vmem:[%s171 + $0x230] sm:$0xff]
        %v278 = vld [vmem:[%s171 + $0x238] sm:$0xff]
        %v279 = vld [vmem:[%s171 + $0x240] sm:$0xff]
        %v280 = vld [vmem:[%s171 + $0x248] sm:$0xff]
        %v281 = vld [vmem:[%s171 + $0x250] sm:$0xff]
        %v282 = vld [vmem:[%s171 + $0x258] sm:$0xff]
        %v283 = vld [vmem:[%s171 + $0x260] sm:$0xff]
        %v284 = vld [vmem:[%s171 + $0x268] sm:$0xff]
        %v285 = vld [vmem:[%s171 + $0x270] sm:$0xff]
        %v286 = vld [vmem:[%s171 + $0x278] sm:$0xff]
        %v287 = vld [vmem:[%s171 + $0x280] sm:$0xff]
        %v288 = vld [vmem:[%s171 + $0x288] sm:$0xff]
        %v289 = vld [vmem:[%s171 + $0x290] sm:$0xff]
        %v290 = vld [vmem:[%s171 + $0x298] sm:$0xff]
        %v291 = vld [vmem:[%s171 + $0x2a0] sm:$0xff]
        %v292 = vld [vmem:[%s171 + $0x2a8] sm:$0xff]
        %v293 = vld [vmem:[%s171 + $0x2b0] sm:$0xff]
        %v294 = vld [vmem:[%s171 + $0x2b8] sm:$0xff]
        %v295 = vld [vmem:[%s171 + $0x2c0] sm:$0xff]
        %v296 = vld [vmem:[%s171 + $0x2c8] sm:$0xff]
        %v297 = vld [vmem:[%s171 + $0x2d0] sm:$0xff]
        %v298 = vld [vmem:[%s171 + $0x2d8] sm:$0xff]
        %v299 = vld [vmem:[%s171 + $0x2e0] sm:$0xff]
        %v300 = vld [vmem:[%s171 + $0x2e8] sm:$0xff]
        %v301 = vld [vmem:[%s171 + $0x2f0] sm:$0xff]
        %v302 = vld [vmem:[%s171 + $0x2f8] sm:$0xff]
        %v303 = vld [vmem:[%s171 + $0x300] sm:$0xff]
        %v304 = vld [vmem:[%s171 + $0x308] sm:$0xff]
        %v305 = vld [vmem:[%s171 + $0x310] sm:$0xff]
        %v306 = vld [vmem:[%s171 + $0x318] sm:$0xff]
        %v307 = vld [vmem:[%s171 + $0x320] sm:$0xff]
        %v308 = vld [vmem:[%s171 + $0x328] sm:$0xff]
        %v309 = vld [vmem:[%s171 + $0x330] sm:$0xff]
        %v310 = vld [vmem:[%s171 + $0x338] sm:$0xff]
        %v311 = vld [vmem:[%s171 + $0x340] sm:$0xff]
        %v312 = vld [vmem:[%s171 + $0x348] sm:$0xff]
        %v313 = vld [vmem:[%s171 + $0x350] sm:$0xff]
        %v314 = vld [vmem:[%s171 + $0x358] sm:$0xff]
        %v315 = vld [vmem:[%s171 + $0x360] sm:$0xff]
        %v316 = vld [vmem:[%s171 + $0x368] sm:$0xff]
        %v317 = vld [vmem:[%s171 + $0x370] sm:$0xff]
        %v318 = vld [vmem:[%s171 + $0x378] sm:$0xff]
        %v319 = vld [vmem:[%s171 + $0x380] sm:$0xff]
        %v320 = vld [vmem:[%s171 + $0x388] sm:$0xff]
        %v321 = vld [vmem:[%s171 + $0x390] sm:$0xff]
        %v322 = vld [vmem:[%s171 + $0x398] sm:$0xff]
        %v323 = vld [vmem:[%s171 + $0x3a0] sm:$0xff]
        %v324 = vld [vmem:[%s171 + $0x3a8] sm:$0xff]
        %v325 = vld [vmem:[%s171 + $0x3b0] sm:$0xff]
        %v326 = vld [vmem:[%s171 + $0x3b8] sm:$0xff]
        %v327 = vld [vmem:[%s171 + $0x3c0] sm:$0xff]
        %v328 = vld [vmem:[%s171 + $0x3c8] sm:$0xff]
        %v329 = vld [vmem:[%s171 + $0x3d0] sm:$0xff]
        %v330 = vld [vmem:[%s171 + $0x3d8] sm:$0xff]
        %v331 = vld [vmem:[%s171 + $0x3e0] sm:$0xff]
        %v332 = vld [vmem:[%s171 + $0x3e8] sm:$0xff]
        %v333 = vld [vmem:[%s171 + $0x3f0] sm:$0xff]
        %v334 = vld [vmem:[%s171 + $0x3f8] sm:$0xff]
        %v335 = vld [vmem:[%s171 + $0x400] sm:$0xff]
        %v336 = vld [vmem:[%s171 + $0x408] sm:$0xff]
        %v337 = vld [vmem:[%s171 + $0x410] sm:$0xff]
        %v338 = vld [vmem:[%s171 + $0x418] sm:$0xff]
        %v339 = vld [vmem:[%s171 + $0x420] sm:$0xff]
        %v340 = vld [vmem:[%s171 + $0x428] sm:$0xff]
        %v341 = vld [vmem:[%s171 + $0x430] sm:$0xff]
        %v342 = vld [vmem:[%s171 + $0x438] sm:$0xff]
        %v343 = vld [vmem:[%s171 + $0x440] sm:$0xff]
        %v344 = vld [vmem:[%s171 + $0x448] sm:$0xff]
        %v345 = vld [vmem:[%s171 + $0x450] sm:$0xff]
        %v346 = vld [vmem:[%s171 + $0x458] sm:$0xff]
        %v347 = vld [vmem:[%s171 + $0x460] sm:$0xff]
        %v348 = vld [vmem:[%s171 + $0x468] sm:$0xff]
        %v349 = vld [vmem:[%s171 + $0x470] sm:$0xff]
        %v350 = vld [vmem:[%s171 + $0x478] sm:$0xff]
        %v351 = vld [vmem:[%s171 + $0x480] sm:$0xff]
        %v352 = vld [vmem:[%s171 + $0x488] sm:$0xff]
        %v353 = vld [vmem:[%s171 + $0x490] sm:$0xff]
        %v354 = vld [vmem:[%s171 + $0x498] sm:$0xff]
        %v355 = vld [vmem:[%s171 + $0x4a0] sm:$0xff]
        %v356 = vld [vmem:[%s171 + $0x4a8] sm:$0xff]
        %v357 = vld [vmem:[%s171 + $0x4b0] sm:$0xff]
        %v358 = vld [vmem:[%s171 + $0x4b8] sm:$0xff]
        %v359 = vld [vmem:[%s171 + $0x4c0] sm:$0xff]
        %v360 = vld [vmem:[%s171 + $0x4c8] sm:$0xff]
        %v361 = vld [vmem:[%s171 + $0x4d0] sm:$0xff]
        %v362 = vld [vmem:[%s171 + $0x4d8] sm:$0xff]
        %v363 = vld [vmem:[%s171 + $0x4e0] sm:$0xff]
        %v364 = vld [vmem:[%s171 + $0x4e8] sm:$0xff]
        %v365 = vld [vmem:[%s171 + $0x4f0] sm:$0xff]
        %v366 = vld [vmem:[%s171 + $0x4f8] sm:$0xff]
        %v367 = vld [vmem:[%s171 + $0x500] sm:$0xff]
        %v368 = vld [vmem:[%s171 + $0x508] sm:$0xff]
        %v369 = vld [vmem:[%s171 + $0x510] sm:$0xff]
        %v370 = vld [vmem:[%s171 + $0x518] sm:$0xff]
        %v371 = vld [vmem:[%s171 + $0x520] sm:$0xff]
        %v372 = vld [vmem:[%s171 + $0x528] sm:$0xff]
        %v373 = vld [vmem:[%s171 + $0x530] sm:$0xff]
        %v374 = vld [vmem:[%s171 + $0x538] sm:$0xff]
        %v375 = vld [vmem:[%s171 + $0x540] sm:$0xff]
        %v376 = vld [vmem:[%s171 + $0x548] sm:$0xff]
        %v377 = vld [vmem:[%s171 + $0x550] sm:$0xff]
        %v378 = vld [vmem:[%s171 + $0x558] sm:$0xff]
        %v379 = vld [vmem:[%s171 + $0x560] sm:$0xff]
        %v380 = vld [vmem:[%s171 + $0x568] sm:$0xff]
        %v381 = vld [vmem:[%s171 + $0x570] sm:$0xff]
        %v382 = vld [vmem:[%s171 + $0x578] sm:$0xff]
        %v383 = vld [vmem:[%s171 + $0x580] sm:$0xff]
        %v384 = vld [vmem:[%s171 + $0x588] sm:$0xff]
        %v385 = vld [vmem:[%s171 + $0x590] sm:$0xff]
        %v386 = vld [vmem:[%s171 + $0x598] sm:$0xff]
        %v387 = vld [vmem:[%s171 + $0x5a0] sm:$0xff]
        %v388 = vld [vmem:[%s171 + $0x5a8] sm:$0xff]
        %v389 = vld [vmem:[%s171 + $0x5b0] sm:$0xff]
        %v390 = vld [vmem:[%s171 + $0x5b8] sm:$0xff]
        %v391 = vld [vmem:[%s171 + $0x5c0] sm:$0xff]
        %v392 = vld [vmem:[%s171 + $0x5c8] sm:$0xff]
        %v393 = vld [vmem:[%s171 + $0x5d0] sm:$0xff]
        %v394 = vld [vmem:[%s171 + $0x5d8] sm:$0xff]
        %v395 = vld [vmem:[%s171 + $0x5e0] sm:$0xff]
        %v396 = vld [vmem:[%s171 + $0x5e8] sm:$0xff]
        %v397 = vld [vmem:[%s171 + $0x5f0] sm:$0xff]
        %v398 = vld [vmem:[%s171 + $0x5f8] sm:$0xff]
        %v399 = vld [vmem:[%s171 + $0x600] sm:$0xff]
        %v400 = vld [vmem:[%s171 + $0x608] sm:$0xff]
        %v401 = vld [vmem:[%s171 + $0x610] sm:$0xff]
        %v402 = vld [vmem:[%s171 + $0x618] sm:$0xff]
        %v403 = vld [vmem:[%s171 + $0x620] sm:$0xff]
        %v404 = vld [vmem:[%s171 + $0x628] sm:$0xff]
        %v405 = vld [vmem:[%s171 + $0x630] sm:$0xff]
        %v406 = vld [vmem:[%s171 + $0x638] sm:$0xff]
        %v407 = vld [vmem:[%s171 + $0x640] sm:$0xff]
        %v408 = vld [vmem:[%s171 + $0x648] sm:$0xff]
        %v409 = vld [vmem:[%s171 + $0x650] sm:$0xff]
        %v410 = vld [vmem:[%s171 + $0x658] sm:$0xff]
        %v411 = vld [vmem:[%s171 + $0x660] sm:$0xff]
        %v412 = vld [vmem:[%s171 + $0x668] sm:$0xff]
        %v413 = vld [vmem:[%s171 + $0x670] sm:$0xff]
        %v414 = vld [vmem:[%s171 + $0x678] sm:$0xff]
        %v415 = vld [vmem:[%s171 + $0x680] sm:$0xff]
        %v416 = vld [vmem:[%s171 + $0x688] sm:$0xff]
        %v417 = vld [vmem:[%s171 + $0x690] sm:$0xff]
        %v418 = vld [vmem:[%s171 + $0x698] sm:$0xff]
        %v419 = vld [vmem:[%s171 + $0x6a0] sm:$0xff]
        %v420 = vld [vmem:[%s171 + $0x6a8] sm:$0xff]
        %v421 = vld [vmem:[%s171 + $0x6b0] sm:$0xff]
        %v422 = vld [vmem:[%s171 + $0x6b8] sm:$0xff]
        %v423 = vld [vmem:[%s171 + $0x6c0] sm:$0xff]
        %v424 = vld [vmem:[%s171 + $0x6c8] sm:$0xff]
        %v425 = vld [vmem:[%s171 + $0x6d0] sm:$0xff]
        %v426 = vld [vmem:[%s171 + $0x6d8] sm:$0xff]
        %v427 = vld [vmem:[%s171 + $0x6e0] sm:$0xff]
        %v428 = vld [vmem:[%s171 + $0x6e8] sm:$0xff]
        %v429 = vld [vmem:[%s171 + $0x6f0] sm:$0xff]
        %v430 = vld [vmem:[%s171 + $0x6f8] sm:$0xff]
        %v431 = vld [vmem:[%s171 + $0x700] sm:$0xff]
        %v432 = vld [vmem:[%s171 + $0x708] sm:$0xff]
        %v433 = vld [vmem:[%s171 + $0x710] sm:$0xff]
        %v434 = vld [vmem:[%s171 + $0x718] sm:$0xff]
        %v435 = vld [vmem:[%s171 + $0x720] sm:$0xff]
        %v436 = vld [vmem:[%s171 + $0x728] sm:$0xff]
        %v437 = vld [vmem:[%s171 + $0x730] sm:$0xff]
        %v438 = vld [vmem:[%s171 + $0x738] sm:$0xff]
        %v439 = vld [vmem:[%s171 + $0x740] sm:$0xff]
        %v440 = vld [vmem:[%s171 + $0x748] sm:$0xff]
        %v441 = vld [vmem:[%s171 + $0x750] sm:$0xff]
        %v442 = vld [vmem:[%s171 + $0x758] sm:$0xff]
        %v443 = vld [vmem:[%s171 + $0x760] sm:$0xff]
        %v444 = vld [vmem:[%s171 + $0x768] sm:$0xff]
        %v445 = vld [vmem:[%s171 + $0x770] sm:$0xff]
        %v446 = vld [vmem:[%s171 + $0x778] sm:$0xff]
        %v447 = vld [vmem:[%s171 + $0x780] sm:$0xff]
        %v448 = vld [vmem:[%s171 + $0x788] sm:$0xff]
        %v449 = vld [vmem:[%s171 + $0x790] sm:$0xff]
        %v450 = vld [vmem:[%s171 + $0x798] sm:$0xff]
        %v451 = vld [vmem:[%s171 + $0x7a0] sm:$0xff]
        %v452 = vld [vmem:[%s171 + $0x7a8] sm:$0xff]
        %v453 = vld [vmem:[%s171 + $0x7b0] sm:$0xff]
        %v454 = vld [vmem:[%s171 + $0x7b8] sm:$0xff]
        %v455 = vld [vmem:[%s171 + $0x7c0] sm:$0xff]
        %v456 = vld [vmem:[%s171 + $0x7c8] sm:$0xff]
        %v457 = vld [vmem:[%s171 + $0x7d0] sm:$0xff]
        %v458 = vld [vmem:[%s171 + $0x7d8] sm:$0xff]
        %v459 = vld [vmem:[%s171 + $0x7e0] sm:$0xff]
        %v460 = vld [vmem:[%s171 + $0x7e8] sm:$0xff]
        %v461 = vld [vmem:[%s171 + $0x7f0] sm:$0xff]
        %v462 = vld [vmem:[%s171 + $0x7f8] sm:$0xff]
        %v463 = vld [vmem:[%s201] sm:$0xff]
        %v464 = vld [vmem:[%s201 + $0x8] sm:$0xff]
        %v465 = vld [vmem:[%s201 + $0x10] sm:$0xff]
        %v466 = vld [vmem:[%s201 + $0x18] sm:$0xff]
        %468 = vset.pattern.permute.xlu0 0
        %469 = vperm.xlu0 %468, %v463
        %v470 = vpop.permute.xlu0 %469
        %473 = vset.pattern.permute.xlu0 0
        %474 = vperm.xlu0 %473, %v464
        %v475 = vpop.permute.xlu0 %474
        %478 = vset.pattern.permute.xlu0 0
        %479 = vperm.xlu0 %478, %v465
        %v480 = vpop.permute.xlu0 %479
        %483 = vset.pattern.permute.xlu0 0
        %484 = vperm.xlu0 %483, %v466
        %v485 = vpop.permute.xlu0 %484
        %v487 = vmul.f32 %v207, %v470
        %v488 = vmul.f32 %v208, %v470
        %v489 = vmul.f32 %v209, %v470
        %v490 = vmul.f32 %v210, %v470
        %v491 = vmul.f32 %v211, %v470
        %v492 = vmul.f32 %v212, %v470
        %v493 = vmul.f32 %v213, %v470
        %v494 = vmul.f32 %v214, %v470
        %v495 = vmul.f32 %v215, %v470
        %v496 = vmul.f32 %v216, %v470
        %v497 = vmul.f32 %v217, %v470
        %v498 = vmul.f32 %v218, %v470
        %v499 = vmul.f32 %v219, %v470
        %v500 = vmul.f32 %v220, %v470
        %v501 = vmul.f32 %v221, %v470
        %v502 = vmul.f32 %v222, %v470
        %v503 = vmul.f32 %v223, %v470
        %v504 = vmul.f32 %v224, %v470
        %v505 = vmul.f32 %v225, %v470
        %v506 = vmul.f32 %v226, %v470
        %v507 = vmul.f32 %v227, %v470
        %v508 = vmul.f32 %v228, %v470
        %v509 = vmul.f32 %v229, %v470
        %v510 = vmul.f32 %v230, %v470
        %v511 = vmul.f32 %v231, %v470
        %v512 = vmul.f32 %v232, %v470
        %v513 = vmul.f32 %v233, %v470
        %v514 = vmul.f32 %v234, %v470
        %v515 = vmul.f32 %v235, %v470
        %v516 = vmul.f32 %v236, %v470
        %v517 = vmul.f32 %v237, %v470
        %v518 = vmul.f32 %v238, %v470
        %v519 = vmul.f32 %v239, %v470
        %v520 = vmul.f32 %v240, %v470
        %v521 = vmul.f32 %v241, %v470
        %v522 = vmul.f32 %v242, %v470
        %v523 = vmul.f32 %v243, %v470
        %v524 = vmul.f32 %v244, %v470
        %v525 = vmul.f32 %v245, %v470
        %v526 = vmul.f32 %v246, %v470
        %v527 = vmul.f32 %v247, %v470
        %v528 = vmul.f32 %v248, %v470
        %v529 = vmul.f32 %v249, %v470
        %v530 = vmul.f32 %v250, %v470
        %v531 = vmul.f32 %v251, %v470
        %v532 = vmul.f32 %v252, %v470
        %v533 = vmul.f32 %v253, %v470
        %v534 = vmul.f32 %v254, %v470
        %v535 = vmul.f32 %v255, %v470
        %v536 = vmul.f32 %v256, %v470
        %v537 = vmul.f32 %v257, %v470
        %v538 = vmul.f32 %v258, %v470
        %v539 = vmul.f32 %v259, %v470
        %v540 = vmul.f32 %v260, %v470
        %v541 = vmul.f32 %v261, %v470
        %v542 = vmul.f32 %v262, %v470
        %v543 = vmul.f32 %v263, %v470
        %v544 = vmul.f32 %v264, %v470
        %v545 = vmul.f32 %v265, %v470
        %v546 = vmul.f32 %v266, %v470
        %v547 = vmul.f32 %v267, %v470
        %v548 = vmul.f32 %v268, %v470
        %v549 = vmul.f32 %v269, %v470
        %v550 = vmul.f32 %v270, %v470
        %v551 = vmul.f32 %v271, %v475
        %v552 = vmul.f32 %v272, %v475
        %v553 = vmul.f32 %v273, %v475
        %v554 = vmul.f32 %v274, %v475
        %v555 = vmul.f32 %v275, %v475
        %v556 = vmul.f32 %v276, %v475
        %v557 = vmul.f32 %v277, %v475
        %v558 = vmul.f32 %v278, %v475
        %v559 = vmul.f32 %v279, %v475
        %v560 = vmul.f32 %v280, %v475
        %v561 = vmul.f32 %v281, %v475
        %v562 = vmul.f32 %v282, %v475
        %v563 = vmul.f32 %v283, %v475
        %v564 = vmul.f32 %v284, %v475
        %v565 = vmul.f32 %v285, %v475
        %v566 = vmul.f32 %v286, %v475
        %v567 = vmul.f32 %v287, %v475
        %v568 = vmul.f32 %v288, %v475
        %v569 = vmul.f32 %v289, %v475
        %v570 = vmul.f32 %v290, %v475
        %v571 = vmul.f32 %v291, %v475
        %v572 = vmul.f32 %v292, %v475
        %v573 = vmul.f32 %v293, %v475
        %v574 = vmul.f32 %v294, %v475
        %v575 = vmul.f32 %v295, %v475
        %v576 = vmul.f32 %v296, %v475
        %v577 = vmul.f32 %v297, %v475
        %v578 = vmul.f32 %v298, %v475
        %v579 = vmul.f32 %v299, %v475
        %v580 = vmul.f32 %v300, %v475
        %v581 = vmul.f32 %v301, %v475
        %v582 = vmul.f32 %v302, %v475
        %v583 = vmul.f32 %v303, %v475
        %v584 = vmul.f32 %v304, %v475
        %v585 = vmul.f32 %v305, %v475
        %v586 = vmul.f32 %v306, %v475
        %v587 = vmul.f32 %v307, %v475
        %v588 = vmul.f32 %v308, %v475
        %v589 = vmul.f32 %v309, %v475
        %v590 = vmul.f32 %v310, %v475
        %v591 = vmul.f32 %v311, %v475
        %v592 = vmul.f32 %v312, %v475
        %v593 = vmul.f32 %v313, %v475
        %v594 = vmul.f32 %v314, %v475
        %v595 = vmul.f32 %v315, %v475
        %v596 = vmul.f32 %v316, %v475
        %v597 = vmul.f32 %v317, %v475
        %v598 = vmul.f32 %v318, %v475
        %v599 = vmul.f32 %v319, %v475
        %v600 = vmul.f32 %v320, %v475
        %v601 = vmul.f32 %v321, %v475
        %v602 = vmul.f32 %v322, %v475
        %v603 = vmul.f32 %v323, %v475
        %v604 = vmul.f32 %v324, %v475
        %v605 = vmul.f32 %v325, %v475
        %v606 = vmul.f32 %v326, %v475
        %v607 = vmul.f32 %v327, %v475
        %v608 = vmul.f32 %v328, %v475
        %v609 = vmul.f32 %v329, %v475
        %v610 = vmul.f32 %v330, %v475
        %v611 = vmul.f32 %v331, %v475
        %v612 = vmul.f32 %v332, %v475
        %v613 = vmul.f32 %v333, %v475
        %v614 = vmul.f32 %v334, %v475
        %v615 = vmul.f32 %v335, %v480
        %v616 = vmul.f32 %v336, %v480
        %v617 = vmul.f32 %v337, %v480
        %v618 = vmul.f32 %v338, %v480
        %v619 = vmul.f32 %v339, %v480
        %v620 = vmul.f32 %v340, %v480
        %v621 = vmul.f32 %v341, %v480
        %v622 = vmul.f32 %v342, %v480
        %v623 = vmul.f32 %v343, %v480
        %v624 = vmul.f32 %v344, %v480
        %v625 = vmul.f32 %v345, %v480
        %v626 = vmul.f32 %v346, %v480
        %v627 = vmul.f32 %v347, %v480
        %v628 = vmul.f32 %v348, %v480
        %v629 = vmul.f32 %v349, %v480
        %v630 = vmul.f32 %v350, %v480
        %v631 = vmul.f32 %v351, %v480
        %v632 = vmul.f32 %v352, %v480
        %v633 = vmul.f32 %v353, %v480
        %v634 = vmul.f32 %v354, %v480
        %v635 = vmul.f32 %v355, %v480
        %v636 = vmul.f32 %v356, %v480
        %v637 = vmul.f32 %v357, %v480
        %v638 = vmul.f32 %v358, %v480
        %v639 = vmul.f32 %v359, %v480
        %v640 = vmul.f32 %v360, %v480
        %v641 = vmul.f32 %v361, %v480
        %v642 = vmul.f32 %v362, %v480
        %v643 = vmul.f32 %v363, %v480
        %v644 = vmul.f32 %v364, %v480
        %v645 = vmul.f32 %v365, %v480
        %v646 = vmul.f32 %v366, %v480
        %v647 = vmul.f32 %v367, %v480
        %v648 = vmul.f32 %v368, %v480
        %v649 = vmul.f32 %v369, %v480
        %v650 = vmul.f32 %v370, %v480
        %v651 = vmul.f32 %v371, %v480
        %v652 = vmul.f32 %v372, %v480
        %v653 = vmul.f32 %v373, %v480
        %v654 = vmul.f32 %v374, %v480
        %v655 = vmul.f32 %v375, %v480
        %v656 = vmul.f32 %v376, %v480
        %v657 = vmul.f32 %v377, %v480
        %v658 = vmul.f32 %v378, %v480
        %v659 = vmul.f32 %v379, %v480
        %v660 = vmul.f32 %v380, %v480
        %v661 = vmul.f32 %v381, %v480
        %v662 = vmul.f32 %v382, %v480
        %v663 = vmul.f32 %v383, %v480
        %v664 = vmul.f32 %v384, %v480
        %v665 = vmul.f32 %v385, %v480
        %v666 = vmul.f32 %v386, %v480
        %v667 = vmul.f32 %v387, %v480
        %v668 = vmul.f32 %v388, %v480
        %v669 = vmul.f32 %v389, %v480
        %v670 = vmul.f32 %v390, %v480
        %v671 = vmul.f32 %v391, %v480
        %v672 = vmul.f32 %v392, %v480
        %v673 = vmul.f32 %v393, %v480
        %v674 = vmul.f32 %v394, %v480
        %v675 = vmul.f32 %v395, %v480
        %v676 = vmul.f32 %v396, %v480
        %v677 = vmul.f32 %v397, %v480
        %v678 = vmul.f32 %v398, %v480
        %v679 = vmul.f32 %v399, %v485
        %v680 = vmul.f32 %v400, %v485
        %v681 = vmul.f32 %v401, %v485
        %v682 = vmul.f32 %v402, %v485
        %v683 = vmul.f32 %v403, %v485
        %v684 = vmul.f32 %v404, %v485
        %v685 = vmul.f32 %v405, %v485
        %v686 = vmul.f32 %v406, %v485
        %v687 = vmul.f32 %v407, %v485
        %v688 = vmul.f32 %v408, %v485
        %v689 = vmul.f32 %v409, %v485
        %v690 = vmul.f32 %v410, %v485
        %v691 = vmul.f32 %v411, %v485
        %v692 = vmul.f32 %v412, %v485
        %v693 = vmul.f32 %v413, %v485
        %v694 = vmul.f32 %v414, %v485
        %v695 = vmul.f32 %v415, %v485
        %v696 = vmul.f32 %v416, %v485
        %v697 = vmul.f32 %v417, %v485
        %v698 = vmul.f32 %v418, %v485
        %v699 = vmul.f32 %v419, %v485
        %v700 = vmul.f32 %v420, %v485
        %v701 = vmul.f32 %v421, %v485
        %v702 = vmul.f32 %v422, %v485
        %v703 = vmul.f32 %v423, %v485
        %v704 = vmul.f32 %v424, %v485
        %v705 = vmul.f32 %v425, %v485
        %v706 = vmul.f32 %v426, %v485
        %v707 = vmul.f32 %v427, %v485
        %v708 = vmul.f32 %v428, %v485
        %v709 = vmul.f32 %v429, %v485
        %v710 = vmul.f32 %v430, %v485
        %v711 = vmul.f32 %v431, %v485
        %v712 = vmul.f32 %v432, %v485
        %v713 = vmul.f32 %v433, %v485
        %v714 = vmul.f32 %v434, %v485
        %v715 = vmul.f32 %v435, %v485
        %v716 = vmul.f32 %v436, %v485
        %v717 = vmul.f32 %v437, %v485
        %v718 = vmul.f32 %v438, %v485
        %v719 = vmul.f32 %v439, %v485
        %v720 = vmul.f32 %v440, %v485
        %v721 = vmul.f32 %v441, %v485
        %v722 = vmul.f32 %v442, %v485
        %v723 = vmul.f32 %v443, %v485
        %v724 = vmul.f32 %v444, %v485
        %v725 = vmul.f32 %v445, %v485
        %v726 = vmul.f32 %v446, %v485
        %v727 = vmul.f32 %v447, %v485
        %v728 = vmul.f32 %v448, %v485
        %v729 = vmul.f32 %v449, %v485
        %v730 = vmul.f32 %v450, %v485
        %v731 = vmul.f32 %v451, %v485
        %v732 = vmul.f32 %v452, %v485
        %v733 = vmul.f32 %v453, %v485
        %v734 = vmul.f32 %v454, %v485
        %v735 = vmul.f32 %v455, %v485
        %v736 = vmul.f32 %v456, %v485
        %v737 = vmul.f32 %v457, %v485
        %v738 = vmul.f32 %v458, %v485
        %v739 = vmul.f32 %v459, %v485
        %v740 = vmul.f32 %v460, %v485
        %v741 = vmul.f32 %v461, %v485
        %v742 = vmul.f32 %v462, %v485
        %743 = vst [vmem:[%s196] sm:$0xff] %v487
        %744 = vst [vmem:[%s196 + $0x8] sm:$0xff] %v488
        %745 = vst [vmem:[%s196 + $0x10] sm:$0xff] %v489
        %746 = vst [vmem:[%s196 + $0x18] sm:$0xff] %v490
        %747 = vst [vmem:[%s196 + $0x20] sm:$0xff] %v491
        %748 = vst [vmem:[%s196 + $0x28] sm:$0xff] %v492
        %749 = vst [vmem:[%s196 + $0x30] sm:$0xff] %v493
        %750 = vst [vmem:[%s196 + $0x38] sm:$0xff] %v494
        %751 = vst [vmem:[%s196 + $0x40] sm:$0xff] %v495
        %752 = vst [vmem:[%s196 + $0x48] sm:$0xff] %v496
        %753 = vst [vmem:[%s196 + $0x50] sm:$0xff] %v497
        %754 = vst [vmem:[%s196 + $0x58] sm:$0xff] %v498
        %755 = vst [vmem:[%s196 + $0x60] sm:$0xff] %v499
        %756 = vst [vmem:[%s196 + $0x68] sm:$0xff] %v500
        %757 = vst [vmem:[%s196 + $0x70] sm:$0xff] %v501
        %758 = vst [vmem:[%s196 + $0x78] sm:$0xff] %v502
        %759 = vst [vmem:[%s196 + $0x80] sm:$0xff] %v503
        %760 = vst [vmem:[%s196 + $0x88] sm:$0xff] %v504
        %761 = vst [vmem:[%s196 + $0x90] sm:$0xff] %v505
        %762 = vst [vmem:[%s196 + $0x98] sm:$0xff] %v506
        %763 = vst [vmem:[%s196 + $0xa0] sm:$0xff] %v507
        %764 = vst [vmem:[%s196 + $0xa8] sm:$0xff] %v508
        %765 = vst [vmem:[%s196 + $0xb0] sm:$0xff] %v509
        %766 = vst [vmem:[%s196 + $0xb8] sm:$0xff] %v510
        %767 = vst [vmem:[%s196 + $0xc0] sm:$0xff] %v511
        %768 = vst [vmem:[%s196 + $0xc8] sm:$0xff] %v512
        %769 = vst [vmem:[%s196 + $0xd0] sm:$0xff] %v513
        %770 = vst [vmem:[%s196 + $0xd8] sm:$0xff] %v514
        %771 = vst [vmem:[%s196 + $0xe0] sm:$0xff] %v515
        %772 = vst [vmem:[%s196 + $0xe8] sm:$0xff] %v516
        %773 = vst [vmem:[%s196 + $0xf0] sm:$0xff] %v517
        %774 = vst [vmem:[%s196 + $0xf8] sm:$0xff] %v518
        %775 = vst [vmem:[%s196 + $0x100] sm:$0xff] %v519
        %776 = vst [vmem:[%s196 + $0x108] sm:$0xff] %v520
        %777 = vst [vmem:[%s196 + $0x110] sm:$0xff] %v521
        %778 = vst [vmem:[%s196 + $0x118] sm:$0xff] %v522
        %779 = vst [vmem:[%s196 + $0x120] sm:$0xff] %v523
        %780 = vst [vmem:[%s196 + $0x128] sm:$0xff] %v524
        %781 = vst [vmem:[%s196 + $0x130] sm:$0xff] %v525
        %782 = vst [vmem:[%s196 + $0x138] sm:$0xff] %v526
        %783 = vst [vmem:[%s196 + $0x140] sm:$0xff] %v527
        %784 = vst [vmem:[%s196 + $0x148] sm:$0xff] %v528
        %785 = vst [vmem:[%s196 + $0x150] sm:$0xff] %v529
        %786 = vst [vmem:[%s196 + $0x158] sm:$0xff] %v530
        %787 = vst [vmem:[%s196 + $0x160] sm:$0xff] %v531
        %788 = vst [vmem:[%s196 + $0x168] sm:$0xff] %v532
        %789 = vst [vmem:[%s196 + $0x170] sm:$0xff] %v533
        %790 = vst [vmem:[%s196 + $0x178] sm:$0xff] %v534
        %791 = vst [vmem:[%s196 + $0x180] sm:$0xff] %v535
        %792 = vst [vmem:[%s196 + $0x188] sm:$0xff] %v536
        %793 = vst [vmem:[%s196 + $0x190] sm:$0xff] %v537
        %794 = vst [vmem:[%s196 + $0x198] sm:$0xff] %v538
        %795 = vst [vmem:[%s196 + $0x1a0] sm:$0xff] %v539
        %796 = vst [vmem:[%s196 + $0x1a8] sm:$0xff] %v540
        %797 = vst [vmem:[%s196 + $0x1b0] sm:$0xff] %v541
        %798 = vst [vmem:[%s196 + $0x1b8] sm:$0xff] %v542
        %799 = vst [vmem:[%s196 + $0x1c0] sm:$0xff] %v543
        %800 = vst [vmem:[%s196 + $0x1c8] sm:$0xff] %v544
        %801 = vst [vmem:[%s196 + $0x1d0] sm:$0xff] %v545
        %802 = vst [vmem:[%s196 + $0x1d8] sm:$0xff] %v546
        %803 = vst [vmem:[%s196 + $0x1e0] sm:$0xff] %v547
        %804 = vst [vmem:[%s196 + $0x1e8] sm:$0xff] %v548
        %805 = vst [vmem:[%s196 + $0x1f0] sm:$0xff] %v549
        %806 = vst [vmem:[%s196 + $0x1f8] sm:$0xff] %v550
        %807 = vst [vmem:[%s196 + $0x200] sm:$0xff] %v551
        %808 = vst [vmem:[%s196 + $0x208] sm:$0xff] %v552
        %809 = vst [vmem:[%s196 + $0x210] sm:$0xff] %v553
        %810 = vst [vmem:[%s196 + $0x218] sm:$0xff] %v554
        %811 = vst [vmem:[%s196 + $0x220] sm:$0xff] %v555
        %812 = vst [vmem:[%s196 + $0x228] sm:$0xff] %v556
        %813 = vst [vmem:[%s196 + $0x230] sm:$0xff] %v557
        %814 = vst [vmem:[%s196 + $0x238] sm:$0xff] %v558
        %815 = vst [vmem:[%s196 + $0x240] sm:$0xff] %v559
        %816 = vst [vmem:[%s196 + $0x248] sm:$0xff] %v560
        %817 = vst [vmem:[%s196 + $0x250] sm:$0xff] %v561
        %818 = vst [vmem:[%s196 + $0x258] sm:$0xff] %v562
        %819 = vst [vmem:[%s196 + $0x260] sm:$0xff] %v563
        %820 = vst [vmem:[%s196 + $0x268] sm:$0xff] %v564
        %821 = vst [vmem:[%s196 + $0x270] sm:$0xff] %v565
        %822 = vst [vmem:[%s196 + $0x278] sm:$0xff] %v566
        %823 = vst [vmem:[%s196 + $0x280] sm:$0xff] %v567
        %824 = vst [vmem:[%s196 + $0x288] sm:$0xff] %v568
        %825 = vst [vmem:[%s196 + $0x290] sm:$0xff] %v569
        %826 = vst [vmem:[%s196 + $0x298] sm:$0xff] %v570
        %827 = vst [vmem:[%s196 + $0x2a0] sm:$0xff] %v571
        %828 = vst [vmem:[%s196 + $0x2a8] sm:$0xff] %v572
        %829 = vst [vmem:[%s196 + $0x2b0] sm:$0xff] %v573
        %830 = vst [vmem:[%s196 + $0x2b8] sm:$0xff] %v574
        %831 = vst [vmem:[%s196 + $0x2c0] sm:$0xff] %v575
        %832 = vst [vmem:[%s196 + $0x2c8] sm:$0xff] %v576
        %833 = vst [vmem:[%s196 + $0x2d0] sm:$0xff] %v577
        %834 = vst [vmem:[%s196 + $0x2d8] sm:$0xff] %v578
        %835 = vst [vmem:[%s196 + $0x2e0] sm:$0xff] %v579
        %836 = vst [vmem:[%s196 + $0x2e8] sm:$0xff] %v580
        %837 = vst [vmem:[%s196 + $0x2f0] sm:$0xff] %v581
        %838 = vst [vmem:[%s196 + $0x2f8] sm:$0xff] %v582
        %839 = vst [vmem:[%s196 + $0x300] sm:$0xff] %v583
        %840 = vst [vmem:[%s196 + $0x308] sm:$0xff] %v584
        %841 = vst [vmem:[%s196 + $0x310] sm:$0xff] %v585
        %842 = vst [vmem:[%s196 + $0x318] sm:$0xff] %v586
        %843 = vst [vmem:[%s196 + $0x320] sm:$0xff] %v587
        %844 = vst [vmem:[%s196 + $0x328] sm:$0xff] %v588
        %845 = vst [vmem:[%s196 + $0x330] sm:$0xff] %v589
        %846 = vst [vmem:[%s196 + $0x338] sm:$0xff] %v590
        %847 = vst [vmem:[%s196 + $0x340] sm:$0xff] %v591
        %848 = vst [vmem:[%s196 + $0x348] sm:$0xff] %v592
        %849 = vst [vmem:[%s196 + $0x350] sm:$0xff] %v593
        %850 = vst [vmem:[%s196 + $0x358] sm:$0xff] %v594
        %851 = vst [vmem:[%s196 + $0x360] sm:$0xff] %v595
        %852 = vst [vmem:[%s196 + $0x368] sm:$0xff] %v596
        %853 = vst [vmem:[%s196 + $0x370] sm:$0xff] %v597
        %854 = vst [vmem:[%s196 + $0x378] sm:$0xff] %v598
        %855 = vst [vmem:[%s196 + $0x380] sm:$0xff] %v599
        %856 = vst [vmem:[%s196 + $0x388] sm:$0xff] %v600
        %857 = vst [vmem:[%s196 + $0x390] sm:$0xff] %v601
        %858 = vst [vmem:[%s196 + $0x398] sm:$0xff] %v602
        %859 = vst [vmem:[%s196 + $0x3a0] sm:$0xff] %v603
        %860 = vst [vmem:[%s196 + $0x3a8] sm:$0xff] %v604
        %861 = vst [vmem:[%s196 + $0x3b0] sm:$0xff] %v605
        %862 = vst [vmem:[%s196 + $0x3b8] sm:$0xff] %v606
        %863 = vst [vmem:[%s196 + $0x3c0] sm:$0xff] %v607
        %864 = vst [vmem:[%s196 + $0x3c8] sm:$0xff] %v608
        %865 = vst [vmem:[%s196 + $0x3d0] sm:$0xff] %v609
        %866 = vst [vmem:[%s196 + $0x3d8] sm:$0xff] %v610
        %867 = vst [vmem:[%s196 + $0x3e0] sm:$0xff] %v611
        %868 = vst [vmem:[%s196 + $0x3e8] sm:$0xff] %v612
        %869 = vst [vmem:[%s196 + $0x3f0] sm:$0xff] %v613
        %870 = vst [vmem:[%s196 + $0x3f8] sm:$0xff] %v614
        %871 = vst [vmem:[%s196 + $0x400] sm:$0xff] %v615
        %872 = vst [vmem:[%s196 + $0x408] sm:$0xff] %v616
        %873 = vst [vmem:[%s196 + $0x410] sm:$0xff] %v617
        %874 = vst [vmem:[%s196 + $0x418] sm:$0xff] %v618
        %875 = vst [vmem:[%s196 + $0x420] sm:$0xff] %v619
        %876 = vst [vmem:[%s196 + $0x428] sm:$0xff] %v620
        %877 = vst [vmem:[%s196 + $0x430] sm:$0xff] %v621
        %878 = vst [vmem:[%s196 + $0x438] sm:$0xff] %v622
        %879 = vst [vmem:[%s196 + $0x440] sm:$0xff] %v623
        %880 = vst [vmem:[%s196 + $0x448] sm:$0xff] %v624
        %881 = vst [vmem:[%s196 + $0x450] sm:$0xff] %v625
        %882 = vst [vmem:[%s196 + $0x458] sm:$0xff] %v626
        %883 = vst [vmem:[%s196 + $0x460] sm:$0xff] %v627
        %884 = vst [vmem:[%s196 + $0x468] sm:$0xff] %v628
        %885 = vst [vmem:[%s196 + $0x470] sm:$0xff] %v629
        %886 = vst [vmem:[%s196 + $0x478] sm:$0xff] %v630
        %887 = vst [vmem:[%s196 + $0x480] sm:$0xff] %v631
        %888 = vst [vmem:[%s196 + $0x488] sm:$0xff] %v632
        %889 = vst [vmem:[%s196 + $0x490] sm:$0xff] %v633
        %890 = vst [vmem:[%s196 + $0x498] sm:$0xff] %v634
        %891 = vst [vmem:[%s196 + $0x4a0] sm:$0xff] %v635
        %892 = vst [vmem:[%s196 + $0x4a8] sm:$0xff] %v636
        %893 = vst [vmem:[%s196 + $0x4b0] sm:$0xff] %v637
        %894 = vst [vmem:[%s196 + $0x4b8] sm:$0xff] %v638
        %895 = vst [vmem:[%s196 + $0x4c0] sm:$0xff] %v639
        %896 = vst [vmem:[%s196 + $0x4c8] sm:$0xff] %v640
        %897 = vst [vmem:[%s196 + $0x4d0] sm:$0xff] %v641
        %898 = vst [vmem:[%s196 + $0x4d8] sm:$0xff] %v642
        %899 = vst [vmem:[%s196 + $0x4e0] sm:$0xff] %v643
        %900 = vst [vmem:[%s196 + $0x4e8] sm:$0xff] %v644
        %901 = vst [vmem:[%s196 + $0x4f0] sm:$0xff] %v645
        %902 = vst [vmem:[%s196 + $0x4f8] sm:$0xff] %v646
        %903 = vst [vmem:[%s196 + $0x500] sm:$0xff] %v647
        %904 = vst [vmem:[%s196 + $0x508] sm:$0xff] %v648
        %905 = vst [vmem:[%s196 + $0x510] sm:$0xff] %v649
        %906 = vst [vmem:[%s196 + $0x518] sm:$0xff] %v650
        %907 = vst [vmem:[%s196 + $0x520] sm:$0xff] %v651
        %908 = vst [vmem:[%s196 + $0x528] sm:$0xff] %v652
        %909 = vst [vmem:[%s196 + $0x530] sm:$0xff] %v653
        %910 = vst [vmem:[%s196 + $0x538] sm:$0xff] %v654
        %911 = vst [vmem:[%s196 + $0x540] sm:$0xff] %v655
        %912 = vst [vmem:[%s196 + $0x548] sm:$0xff] %v656
        %913 = vst [vmem:[%s196 + $0x550] sm:$0xff] %v657
        %914 = vst [vmem:[%s196 + $0x558] sm:$0xff] %v658
        %915 = vst [vmem:[%s196 + $0x560] sm:$0xff] %v659
        %916 = vst [vmem:[%s196 + $0x568] sm:$0xff] %v660
        %917 = vst [vmem:[%s196 + $0x570] sm:$0xff] %v661
        %918 = vst [vmem:[%s196 + $0x578] sm:$0xff] %v662
        %919 = vst [vmem:[%s196 + $0x580] sm:$0xff] %v663
        %920 = vst [vmem:[%s196 + $0x588] sm:$0xff] %v664
        %921 = vst [vmem:[%s196 + $0x590] sm:$0xff] %v665
        %922 = vst [vmem:[%s196 + $0x598] sm:$0xff] %v666
        %923 = vst [vmem:[%s196 + $0x5a0] sm:$0xff] %v667
        %924 = vst [vmem:[%s196 + $0x5a8] sm:$0xff] %v668
        %925 = vst [vmem:[%s196 + $0x5b0] sm:$0xff] %v669
        %926 = vst [vmem:[%s196 + $0x5b8] sm:$0xff] %v670
        %927 = vst [vmem:[%s196 + $0x5c0] sm:$0xff] %v671
        %928 = vst [vmem:[%s196 + $0x5c8] sm:$0xff] %v672
        %929 = vst [vmem:[%s196 + $0x5d0] sm:$0xff] %v673
        %930 = vst [vmem:[%s196 + $0x5d8] sm:$0xff] %v674
        %931 = vst [vmem:[%s196 + $0x5e0] sm:$0xff] %v675
        %932 = vst [vmem:[%s196 + $0x5e8] sm:$0xff] %v676
        %933 = vst [vmem:[%s196 + $0x5f0] sm:$0xff] %v677
        %934 = vst [vmem:[%s196 + $0x5f8] sm:$0xff] %v678
        %935 = vst [vmem:[%s196 + $0x600] sm:$0xff] %v679
        %936 = vst [vmem:[%s196 + $0x608] sm:$0xff] %v680
        %937 = vst [vmem:[%s196 + $0x610] sm:$0xff] %v681
        %938 = vst [vmem:[%s196 + $0x618] sm:$0xff] %v682
        %939 = vst [vmem:[%s196 + $0x620] sm:$0xff] %v683
        %940 = vst [vmem:[%s196 + $0x628] sm:$0xff] %v684
        %941 = vst [vmem:[%s196 + $0x630] sm:$0xff] %v685
        %942 = vst [vmem:[%s196 + $0x638] sm:$0xff] %v686
        %943 = vst [vmem:[%s196 + $0x640] sm:$0xff] %v687
        %944 = vst [vmem:[%s196 + $0x648] sm:$0xff] %v688
        %945 = vst [vmem:[%s196 + $0x650] sm:$0xff] %v689
        %946 = vst [vmem:[%s196 + $0x658] sm:$0xff] %v690
        %947 = vst [vmem:[%s196 + $0x660] sm:$0xff] %v691
        %948 = vst [vmem:[%s196 + $0x668] sm:$0xff] %v692
        %949 = vst [vmem:[%s196 + $0x670] sm:$0xff] %v693
        %950 = vst [vmem:[%s196 + $0x678] sm:$0xff] %v694
        %951 = vst [vmem:[%s196 + $0x680] sm:$0xff] %v695
        %952 = vst [vmem:[%s196 + $0x688] sm:$0xff] %v696
        %953 = vst [vmem:[%s196 + $0x690] sm:$0xff] %v697
        %954 = vst [vmem:[%s196 + $0x698] sm:$0xff] %v698
        %955 = vst [vmem:[%s196 + $0x6a0] sm:$0xff] %v699
        %956 = vst [vmem:[%s196 + $0x6a8] sm:$0xff] %v700
        %957 = vst [vmem:[%s196 + $0x6b0] sm:$0xff] %v701
        %958 = vst [vmem:[%s196 + $0x6b8] sm:$0xff] %v702
        %959 = vst [vmem:[%s196 + $0x6c0] sm:$0xff] %v703
        %960 = vst [vmem:[%s196 + $0x6c8] sm:$0xff] %v704
        %961 = vst [vmem:[%s196 + $0x6d0] sm:$0xff] %v705
        %962 = vst [vmem:[%s196 + $0x6d8] sm:$0xff] %v706
        %963 = vst [vmem:[%s196 + $0x6e0] sm:$0xff] %v707
        %964 = vst [vmem:[%s196 + $0x6e8] sm:$0xff] %v708
        %965 = vst [vmem:[%s196 + $0x6f0] sm:$0xff] %v709
        %966 = vst [vmem:[%s196 + $0x6f8] sm:$0xff] %v710
        %967 = vst [vmem:[%s196 + $0x700] sm:$0xff] %v711
        %968 = vst [vmem:[%s196 + $0x708] sm:$0xff] %v712
        %969 = vst [vmem:[%s196 + $0x710] sm:$0xff] %v713
        %970 = vst [vmem:[%s196 + $0x718] sm:$0xff] %v714
        %971 = vst [vmem:[%s196 + $0x720] sm:$0xff] %v715
        %972 = vst [vmem:[%s196 + $0x728] sm:$0xff] %v716
        %973 = vst [vmem:[%s196 + $0x730] sm:$0xff] %v717
        %974 = vst [vmem:[%s196 + $0x738] sm:$0xff] %v718
        %975 = vst [vmem:[%s196 + $0x740] sm:$0xff] %v719
        %976 = vst [vmem:[%s196 + $0x748] sm:$0xff] %v720
        %977 = vst [vmem:[%s196 + $0x750] sm:$0xff] %v721
        %978 = vst [vmem:[%s196 + $0x758] sm:$0xff] %v722
        %979 = vst [vmem:[%s196 + $0x760] sm:$0xff] %v723
        %980 = vst [vmem:[%s196 + $0x768] sm:$0xff] %v724
        %981 = vst [vmem:[%s196 + $0x770] sm:$0xff] %v725
        %982 = vst [vmem:[%s196 + $0x778] sm:$0xff] %v726
        %983 = vst [vmem:[%s196 + $0x780] sm:$0xff] %v727
        %984 = vst [vmem:[%s196 + $0x788] sm:$0xff] %v728
        %985 = vst [vmem:[%s196 + $0x790] sm:$0xff] %v729
        %986 = vst [vmem:[%s196 + $0x798] sm:$0xff] %v730
        %987 = vst [vmem:[%s196 + $0x7a0] sm:$0xff] %v731
        %988 = vst [vmem:[%s196 + $0x7a8] sm:$0xff] %v732
        %989 = vst [vmem:[%s196 + $0x7b0] sm:$0xff] %v733
        %990 = vst [vmem:[%s196 + $0x7b8] sm:$0xff] %v734
        %991 = vst [vmem:[%s196 + $0x7c0] sm:$0xff] %v735
        %992 = vst [vmem:[%s196 + $0x7c8] sm:$0xff] %v736
        %993 = vst [vmem:[%s196 + $0x7d0] sm:$0xff] %v737
        %994 = vst [vmem:[%s196 + $0x7d8] sm:$0xff] %v738
        %995 = vst [vmem:[%s196 + $0x7e0] sm:$0xff] %v739
        %996 = vst [vmem:[%s196 + $0x7e8] sm:$0xff] %v740
        %997 = vst [vmem:[%s196 + $0x7f0] sm:$0xff] %v741
        %998 = vst [vmem:[%s196 + $0x7f8] sm:$0xff] %v742
        %s999 = sand.u32 %s95, 1
        %s1000 = scalar_lea.sflag [#allocation4], %s999
        %s1001 = sand.u32 %s95, 1
        %s1002 = smul.addr %s1001, 2048
        %s1003 = scalar_lea.vmem [#allocation5], %s1002
        // Predicated region
        $region33: #{tpu_custom_call.1} parent=27 // pred_check
          %p1004 = pneg %p105
        $region34: #{tpu_custom_call.1} parent=27 // pred_check_branch
          %1006 = sbr.rel (%p1004) target = $region36
        $region35: #{tpu_custom_call.1} parent=27 // pred_region
          %s1007 = smul.u32 4, %s23
          %s1008 = smul.u32 64, %s24
          %s1010 = ssub.s32 32768, 32768
          %1011 = vsyncadd %s1000, %s1010
          %s1012 = smul.addr %s1007, 64
          %s1013 = sadd.s32 %s1008, %s1012
          %s1014 = smul.addr %s1013, 128
          %s1015 = scalar_lea.hbm %s2, %s1014
          %s1016 = sshll.u32 %s1003, 4
          %s1017 = int_to_ptr.vmem [resolvable:$true] %s1016
          %1022 = dma.vmem_to_hbm [thread:$0]  %s1017, 32768, %s1015, %s1000, 8192, 8192, 512
        $region36: #{tpu_custom_call.1} parent=27 // pred_fallthru
          _
      $region28: #{tpu_custom_call.1} parent=5 // pred_fallthru
        _
      %p1023 = scmp.le.s32.totalorder 2, %s14
      // Predicated region
      $region37: #{tpu_custom_call.1} parent=5 // pred_check
        %p1024 = pneg %p1023
      $region38: #{tpu_custom_call.1} parent=5 // pred_check_branch
        %1026 = sbr.rel (%p1024) target = $region40
      $region39: #{tpu_custom_call.1} parent=5 // pred_region
        %s1027 = ssub.s32 %s14, 2
        // Predicated region
        $region41: #{tpu_custom_call.1} parent=39 // pred_check
          %p1028 = pneg %p111
        $region42: #{tpu_custom_call.1} parent=39 // pred_check_branch
          %1030 = sbr.rel (%p1028) target = $region44
        $region43: #{tpu_custom_call.1} parent=39 // pred_region
          %s1031 = sand.u32 %s96, 1
          %s1032 = scalar_lea.sflag [#allocation4], %s1031
          %s1033 = sand.u32 %s96, 1
          %s1034 = smul.addr %s1033, 2048
          %s1035 = scalar_lea.vmem [#allocation5], %s1034
          %1036 = dma.done %s1032, 32768
        $region44: #{tpu_custom_call.1} parent=39 // pred_fallthru
          _
      $region40: #{tpu_custom_call.1} parent=5 // pred_fallthru
        _
    $region6: #{tpu_custom_call.1} parent=1 // loop_footer
      %s18 = sadd.s32 1, %s14
    $region7: #{tpu_custom_call.1} parent=1 // loop_footer_branch
      %13 = sbr.rel target = $region3
    $region8: #{tpu_custom_call.1} parent=1 // loop_exit
      _
    %1037 = vsyncpa [#allocation3], 1
    %s1038 = scalar_lea.sflag [#allocation3], 1
    %1039 = vsyncpa %s1038, 1
    %1040 = vsyncpa [#allocation4], 1
    %s1041 = scalar_lea.sflag [#allocation4], 1
    %1042 = vsyncpa %s1041, 1

</llo_original>
